<compile_context>
chip_gen: v7x
topology: tpu7x:2x2x1
jax: 0.10.0
libtpu: 0.0.40
codegen_flags: <defaults>
</compile_context>

<pallas_src>
import jax
import jax.numpy as jnp
from jax.experimental import pallas as pl
from jax.experimental.pallas import tpu as pltpu

_VMEM_LIMIT = 32 * 1024 * 1024   # <=32 MiB scoped VMEM (v7x has only 64 MiB/TC)
_BN_EPS = 1e-5
_LANE = 128


def _round_up(x, m):
    return ((x + m - 1) // m) * m


# ----------------------------------------------------------------------------
# Kernel 1: tiled matmul   out = maybe_relu(A @ W + shift)
# ----------------------------------------------------------------------------
def _tiled_matmul(a, w_bf16, shift, relu):
    """a: (M, K) f32 (unpadded), w: (Kp, Cp) bf16, shift: (1, Cp) f32.
    Returns (Mp, Cp) f32; caller slices the padding away."""
    M, K = a.shape
    Kp, Cp = w_bf16.shape
    tm = 256 if M >= 256 else _round_up(M, 8)
    Mp = _round_up(M, tm)
    tn = 256 if Cp % 256 == 0 else 128
    tk = 256 if Kp % 256 == 0 else 128
    a_p = jnp.pad(a, ((0, Mp - M), (0, Kp - K)))

    def kernel(a_ref, w_ref, s_ref, o_ref, acc_ref):
        @pl.when(pl.program_id(2) == 0)
        def _init():
            acc_ref[...] = jnp.zeros_like(acc_ref)

        acc_ref[...] += jnp.dot(
            a_ref[...].astype(jnp.bfloat16),
            w_ref[...],
            preferred_element_type=jnp.float32,
        )

        @pl.when(pl.program_id(2) == pl.num_programs(2) - 1)
        def _fin():
            y = acc_ref[...] + s_ref[...]
            if relu:
                y = jnp.maximum(y, 0.0)
            o_ref[...] = y.astype(o_ref.dtype)

    return pl.pallas_call(
        kernel,
        out_shape=jax.ShapeDtypeStruct((Mp, Cp), jnp.float32),
        grid=(Mp // tm, Cp // tn, Kp // tk),
        in_specs=[
            pl.BlockSpec((tm, tk), lambda i, j, k: (i, k)),
            pl.BlockSpec((tk, tn), lambda i, j, k: (k, j)),
            pl.BlockSpec((1, tn), lambda i, j, k: (0, j)),
        ],
        out_specs=pl.BlockSpec((tm, tn), lambda i, j, k: (i, j)),
        scratch_shapes=[pltpu.VMEM((tm, tn), jnp.float32)],
        compiler_params=pltpu.CompilerParams(
            dimension_semantics=("parallel", "parallel", "arbitrary"),
            vmem_limit_bytes=_VMEM_LIMIT,
        ),
    )(a_p, w_bf16, shift)


# ----------------------------------------------------------------------------
# Flat-layout helpers for the direct 3x3 conv (rows laid out Wp-wide; the
# 2*d "wrap" columns per row are garbage that the wrapper drops).
# ----------------------------------------------------------------------------
def _dense_to_flat(x, Wp, Mq):
    N, Ho, Wo, C = x.shape
    xf = jnp.pad(x, ((0, 0), (0, 0), (0, Wp - Wo), (0, 0))).reshape(N, Ho * Wp, C)
    return xf[:, :Mq]


def _flat_to_dense(y, Ho, Wo, Wp):
    N, Mq, C = y.shape
    y = jnp.pad(y, ((0, 0), (0, Ho * Wp - Mq), (0, 0))).reshape(N, Ho, Wp, C)
    return y[:, :, :Wo, :]


# ----------------------------------------------------------------------------
# Kernel 2: direct 3x3 stride-1 dilated conv + BN-shift [+ residual] + ReLU.
#   No HBM im2col: the 9 taps are contiguous row-slices of the flattened padded
#   activation, accumulated in-kernel.  grid = (N, Cout_p / tn).
# ----------------------------------------------------------------------------
def conv3x3_bn_direct(x, w9, shift, dil, residual=None, relu=True):
    N, H, W, Cin = x.shape
    KK, Cin_w, Cp = w9.shape
    assert Cin == Cin_w, (Cin, Cin_w)
    d = dil
    Ho, Wo = H, W                       # stride 1, padding == dilation
    Hp, Wp = H + 2 * d, W + 2 * d
    Mq = (Ho - 1) * Wp + Wo             # valid flat output rows
    tn = 256 if Cp % 256 == 0 else 128

    xf = jnp.pad(x, ((0, 0), (d, d), (d, d), (0, 0))).reshape(N, Hp * Wp, Cin)

    inputs = [xf, w9, shift]
    in_specs = [
        pl.BlockSpec((None, Hp * Wp, Cin), lambda n, c: (n, 0, 0)),
        pl.BlockSpec((KK, Cin, tn), lambda n, c: (0, 0, c)),
        pl.BlockSpec((1, tn), lambda n, c: (0, c)),
    ]
    has_res = residual is not None
    if has_res:
        assert residual.shape[-1] == Cp, (residual.shape, Cp)
        inputs.append(_dense_to_flat(residual, Wp, Mq))
        in_specs.append(pl.BlockSpec((None, Mq, tn), lambda n, c: (n, 0, c)))

    def kernel(*refs):
        if has_res:
            x_ref, w_ref, s_ref, r_ref, o_ref = refs
        else:
            x_ref, w_ref, s_ref, o_ref = refs
        acc = jnp.zeros((Mq, tn), jnp.float32)
        for i in range(3):
            for j in range(3):
                off = i * d * Wp + j * d
                a = x_ref[off:off + Mq, :].astype(jnp.bfloat16)
                acc = acc + jnp.dot(a, w_ref[i * 3 + j],
                                    preferred_element_type=jnp.float32)
        y = acc + s_ref[...]
        if has_res:
            y = y + r_ref[...]
        if relu:
            y = jnp.maximum(y, 0.0)
        o_ref[...] = y

    out = pl.pallas_call(
        kernel,
        out_shape=jax.ShapeDtypeStruct((N, Mq, Cp), jnp.float32),
        grid=(N, Cp // tn),
        in_specs=in_specs,
        out_specs=pl.BlockSpec((None, Mq, tn), lambda n, c: (n, 0, c)),
        compiler_params=pltpu.CompilerParams(
            dimension_semantics=("parallel", "parallel"),
            vmem_limit_bytes=_VMEM_LIMIT,
        ),
    )(*inputs)
    # TODO(synk): also tile the flat-row (Mq) axis for very large spatial extents.
    return _flat_to_dense(out, Ho, Wo, Wp)


# ----------------------------------------------------------------------------
# im2col patch extraction (wrapper-level JAX) — only for the one-time 7x7 seed
# conv, the single 3x3/s2 conv and the maxpool.
# ----------------------------------------------------------------------------
def _extract_patches(x, ksize, stride, dilation, padding, pad_value):
    kh, kw = ksize
    (pt, pb), (pl_, pr) = padding
    xp = jnp.pad(x, ((0, 0), (pt, pb), (pl_, pr), (0, 0)),
                 constant_values=pad_value)
    N, Hp, Wp, C = xp.shape
    Ho = (Hp - dilation * (kh - 1) - 1) // stride + 1
    Wo = (Wp - dilation * (kw - 1) - 1) // stride + 1
    cols = []
    for i in range(kh):
        for j in range(kw):
            cols.append(
                xp[:,
                   i * dilation: i * dilation + (Ho - 1) * stride + 1: stride,
                   j * dilation: j * dilation + (Wo - 1) * stride + 1: stride,
                   :])
    return jnp.stack(cols, axis=3)  # (N, Ho, Wo, kh*kw, C)


def conv_bn_im2col(x, wm, shift, ksize, stride, dilation, padding, relu):
    N = x.shape[0]
    patches = _extract_patches(
        x, ksize, stride, dilation, ((padding, padding), (padding, padding)), 0.0)
    _, Ho, Wo, KK, Cin = patches.shape
    A = patches.reshape(N * Ho * Wo, KK * Cin)
    y = _tiled_matmul(A, wm, shift, relu)
    return y[: N * Ho * Wo].reshape(N, Ho, Wo, wm.shape[1])


def conv1x1_bn_pallas(x, wm, shift, stride, relu):
    if stride != 1:
        x = x[:, ::stride, ::stride, :]
    N, H, W, C = x.shape
    y = _tiled_matmul(x.reshape(N * H * W, C), wm, shift, relu)
    return y[: N * H * W].reshape(N, H, W, wm.shape[1])


def linear_pallas(x, wm, shift, n_out):
    y = _tiled_matmul(x, wm, shift, relu=False)
    return y[: x.shape[0], :n_out]


# ----------------------------------------------------------------------------
# Kernel 3: MaxPool2d(3, stride=2, padding=1, ceil_mode=True)
# ----------------------------------------------------------------------------
def maxpool2d_ceil_pallas(x, ksize=3, stride=2, pad=1):
    N, H, W, C = x.shape

    def out_sz(L):
        o = -(-(L + 2 * pad - ksize) // stride) + 1      # ceil mode
        if (o - 1) * stride >= L + pad:                  # window-start constraint
            o -= 1
        return o

    Ho, Wo = out_sz(H), out_sz(W)
    pb = max(0, (Ho - 1) * stride + ksize - H - pad)
    pr = max(0, (Wo - 1) * stride + ksize - W - pad)
    patches = _extract_patches(
        x, (ksize, ksize), stride, 1, ((pad, pb), (pad, pr)), pad_value=-jnp.inf)
    KK = ksize * ksize
    M = N * Ho * Wo
    tm = 256 if M >= 256 else _round_up(M, 8)
    Mp = _round_up(M, tm)
    pm = jnp.pad(patches.reshape(M, KK, C), ((0, Mp - M), (0, 0), (0, 0)))

    def kernel(x_ref, o_ref):
        r = x_ref[:, 0, :]
        for t in range(1, KK):
            r = jnp.maximum(r, x_ref[:, t, :])
        o_ref[...] = r

    out = pl.pallas_call(
        kernel,
        out_shape=jax.ShapeDtypeStruct((Mp, C), jnp.float32),
        grid=(Mp // tm,),
        in_specs=[pl.BlockSpec((tm, KK, C), lambda i: (i, 0, 0))],
        out_specs=pl.BlockSpec((tm, C), lambda i: (i, 0)),
        compiler_params=pltpu.CompilerParams(
            dimension_semantics=("parallel",),
            vmem_limit_bytes=_VMEM_LIMIT,
        ),
    )(pm)
    return out[:M].reshape(N, Ho, Wo, C)


# ----------------------------------------------------------------------------
# Kernel 4: global average pool (AdaptiveAvgPool2d((1,1)) + flatten)
# ----------------------------------------------------------------------------
def avgpool_global_pallas(x):
    N, H, W, C = x.shape
    HW = H * W
    thw = 512 if HW >= 512 else _round_up(HW, 8)
    HWp = _round_up(HW, thw)
    xr = jnp.pad(x.reshape(N, HW, C), ((0, 0), (0, HWp - HW), (0, 0)))
    inv = 1.0 / float(HW)

    def kernel(x_ref, o_ref, acc_ref):
        @pl.when(pl.program_id(0) == 0)
        def _init():
            acc_ref[...] = jnp.zeros_like(acc_ref)

        acc_ref[...] += jnp.sum(x_ref[...], axis=1)

        @pl.when(pl.program_id(0) == pl.num_programs(0) - 1)
        def _fin():
            o_ref[...] = acc_ref[...] * inv

    return pl.pallas_call(
        kernel,
        out_shape=jax.ShapeDtypeStruct((N, C), jnp.float32),
        grid=(HWp // thw,),
        in_specs=[pl.BlockSpec((N, thw, C), lambda k: (0, k, 0))],
        out_specs=pl.BlockSpec((N, C), lambda k: (0, 0)),
        scratch_shapes=[pltpu.VMEM((N, C), jnp.float32)],
        compiler_params=pltpu.CompilerParams(
            dimension_semantics=("arbitrary",),
            vmem_limit_bytes=_VMEM_LIMIT,
        ),
    )(xr)


# ----------------------------------------------------------------------------
# Model assembly
# ----------------------------------------------------------------------------
def residual_block_fwd(x, blk):
    d, s = blk["dil"], blk["stride"]
    c1 = blk["conv1"]
    if c1["type"] == "direct":
        out = conv3x3_bn_direct(x, c1["w9"], c1["shift"], d, residual=None, relu=True)
    else:  # the single stride-2 3x3 conv keeps the explicit im2col path
        out = conv_bn_im2col(x, c1["wm"], c1["shift"], (3, 3), s, d, d, relu=True)
    if blk["ds"] is not None:
        ds = blk["ds"]
        residual = conv1x1_bn_pallas(x, ds["wm"], ds["shift"], s, relu=False)
    else:
        residual = x
    c2 = blk["conv2"]
    # relu(residual + bn2(conv2(out))) fused in the direct conv kernel.
    return conv3x3_bn_direct(out, c2["w9"], c2["shift"], d,
                             residual=residual, relu=True)


def deeplab_fc_forward(params, x_nchw, task):
    x = jnp.transpose(x_nchw, (0, 2, 3, 1)).astype(jnp.float32)  # NCHW -> NHWC
    seed = params["seed"]
    x = conv_bn_im2col(x, seed["wm"], seed["shift"], (7, 7), 2, 1, 3, relu=True)
    x = maxpool2d_ceil_pallas(x)
    for blk in params["blocks"]:
        x = residual_block_fwd(x, blk)
    feat = avgpool_global_pallas(x)          # (N, 512)
    # nn.Dropout(p=0.2) is identity in eval mode.
    head = params["heads"][task]
    return linear_pallas(feat, head["wm"], head["shift"], head["cls"])


# ----------------------------------------------------------------------------
# Parameter preparation: fold BN scale into bf16 weights, hoist all
# transpose/reshape/channel-padding out of the forward pass.
# ----------------------------------------------------------------------------
def _fold_bn(w, bn):
    inv = 1.0 / jnp.sqrt(bn["var"] + _BN_EPS)
    scale = bn["gamma"] * inv
    shift = bn["beta"] - bn["mean"] * scale
    return w * scale[:, None, None, None], shift


def _prep_conv3x3(w, bn, cin_p):
    cout, cin, kh, kw = w.shape
    wf, shift = _fold_bn(w, bn)
    cp = _round_up(cout, _LANE)
    wt = jnp.transpose(wf, (2, 3, 1, 0)).reshape(kh * kw, cin, cout)
    wt = jnp.pad(wt, ((0, 0), (0, cin_p - cin), (0, cp - cout))).astype(jnp.bfloat16)
    sh = jnp.pad(shift, (0, cp - cout)).reshape(1, cp).astype(jnp.float32)
    return dict(w9=wt, shift=sh)


def _prep_conv_mat(w, bn, cin_p):
    cout, cin, kh, kw = w.shape
    wf, shift = _fold_bn(w, bn)
    cp = _round_up(cout, _LANE)
    wf = jnp.pad(wf, ((0, 0), (0, cin_p - cin), (0, 0), (0, 0)))
    K = kh * kw * cin_p
    Kp = _round_up(K, _LANE)
    wm = jnp.transpose(wf, (2, 3, 1, 0)).reshape(K, cout)
    wm = jnp.pad(wm, ((0, Kp - K), (0, cp - cout))).astype(jnp.bfloat16)
    sh = jnp.pad(shift, (0, cp - cout)).reshape(1, cp).astype(jnp.float32)
    return dict(wm=wm, shift=sh)


def init_params(key, tasks, cls_num):
    layers = [3, 4, 6, 3]
    strides = [1, 2, 1, 1]
    dilations = [1, 1, 2, 4]
    filt_sizes = [64, 128, 256, 512]

    keys = iter(jax.random.split(key, 128))

    def conv_w(shape):  # matches m.weight.data.normal_(0, 0.01)
        return 0.01 * jax.random.normal(next(keys), shape, dtype=jnp.float32)

    def bn_p(c):        # BN eval: gamma=1, beta=0, running_mean=0, running_var=1
        return dict(gamma=jnp.ones((c,), jnp.float32),
                    beta=jnp.zeros((c,), jnp.float32),
                    mean=jnp.zeros((c,), jnp.float32),
                    var=jnp.ones((c,), jnp.float32))

    params = {"seed": _prep_conv_mat(conv_w((64, 3, 7, 7)), bn_p(64), cin_p=3),
              "blocks": []}

    inplanes = 64
    for seg in range(4):
        planes = filt_sizes[seg]
        for b_idx in range(layers[seg]):
            stride = strides[seg] if b_idx == 0 else 1
            dil = dilations[seg]
            cin_p = _round_up(inplanes, _LANE)
            blk = {"stride": stride, "dil": dil}
            w1, bn1 = conv_w((planes, inplanes, 3, 3)), bn_p(planes)
            if stride == 1:
                blk["conv1"] = dict(type="direct", **_prep_conv3x3(w1, bn1, cin_p))
            else:
                blk["conv1"] = dict(type="mat", **_prep_conv_mat(w1, bn1, cin_p))
            w2, bn2 = conv_w((planes, planes, 3, 3)), bn_p(planes)
            blk["conv2"] = dict(type="direct",
                                **_prep_conv3x3(w2, bn2, _round_up(planes, _LANE)))
            ds = None
            if b_idx == 0 and (stride != 1 or inplanes != planes or dil in (2, 4)):
                ds = dict(**_prep_conv_mat(conv_w((planes, inplanes, 1, 1)),
                                           bn_p(planes), cin_p))
            blk["ds"] = ds
            params["blocks"].append(blk)
            inplanes = planes

    params["heads"] = {}
    for task in tasks:
        n_cls = cls_num[task]
        wh = 0.01 * jax.random.normal(next(keys), (n_cls, 512), dtype=jnp.float32)
        bh = jnp.zeros((n_cls,), jnp.float32)
        cp = _round_up(n_cls, _LANE)
        wm = jnp.pad(wh.T, ((0, 0), (0, cp - n_cls))).astype(jnp.bfloat16)
        sh = jnp.pad(bh, (0, cp - n_cls)).reshape(1, cp).astype(jnp.float32)
        params["heads"][task] = dict(wm=wm, shift=sh, cls=n_cls)
    return params


if __name__ == "__main__":
    tasks = ["segment_semantic", "normal"]
    cls_num = {"segment_semantic": 10, "normal": 7}

    key = jax.random.PRNGKey(0)
    pkey, xkey = jax.random.split(key)
    params = init_params(pkey, tasks, cls_num)

    # Small NCHW input consistent with the module (RGB input, 3 channels).
    x = jax.random.normal(xkey, (2, 3, 16, 16), dtype=jnp.float32)

    out = deeplab_fc_forward(params, x, "segment_semantic")
    out = jax.block_until_ready(out)
    assert out.shape == (2, cls_num["segment_semantic"]), out.shape
    assert out.dtype == jnp.float32

    print("KERNEL_OK")
</pallas_src>

<mosaic_0001>
module attributes {stable_mosaic.version = 11 : i64} {
  func.func @kernel(%arg0: i32, %arg1: i32, %arg2: i32, %arg3: memref<128x256xf32, #tpu.memory_space<vmem>>, %arg4: memref<256x128xbf16, #tpu.memory_space<vmem>>, %arg5: memref<1x128xf32, #tpu.memory_space<vmem>>, %arg6: memref<128x128xf32, #tpu.memory_space<vmem>>, %arg7: memref<128x128xf32, #tpu.memory_space<vmem>>) attributes {dimension_semantics = [#tpu.dimension_semantics<parallel>, #tpu.dimension_semantics<parallel>, #tpu.dimension_semantics<arbitrary>], iteration_bounds = array<i64: 1, 1, 1>, scalar_prefetch = 0 : i64, scratch_operands = 1 : i64, tpu.core_type = #tpu.core_type<tc>, window_params = [{transform_indices = @transform_0, window_bounds = array<i64: 128, 256>}, {transform_indices = @transform_1, window_bounds = array<i64: 256, 128>}, {transform_indices = @transform_2, window_bounds = array<i64: 1, 128>}, {transform_indices = @transform_3, window_bounds = array<i64: 128, 128>}]} {
    %c0_i32 = arith.constant 0 : i32
    %0 = arith.cmpi eq, %arg2, %c0_i32 : i32
    %1 = arith.extui %0 : i1 to i32
    %c0_i32_0 = arith.constant 0 : i32
    %2 = arith.cmpi ne, %1, %c0_i32_0 : i32
    scf.if %2 {
      %cst_10 = arith.constant 0.000000e+00 : f32
      %13 = vector.broadcast %cst_10 : f32 to vector<128x128xf32>
      %c0_11 = arith.constant 0 : index
      %c0_12 = arith.constant 0 : index
      %14 = vector.load %arg7[%c0_11, %c0_12] : memref<128x128xf32, #tpu.memory_space<vmem>>, vector<128x128xf32>
      tpu.vector_store %arg7[%c0_11, %c0_12], %13 {strides = array<i32>} : memref<128x128xf32, #tpu.memory_space<vmem>>, vector<128x128xf32>,
    } else {
    }
    %c0 = arith.constant 0 : index
    %c0_1 = arith.constant 0 : index
    %3 = vector.load %arg7[%c0, %c0_1] : memref<128x128xf32, #tpu.memory_space<vmem>>, vector<128x128xf32>
    %c0_2 = arith.constant 0 : index
    %c0_3 = arith.constant 0 : index
    %4 = vector.load %arg3[%c0_2, %c0_3] : memref<128x256xf32, #tpu.memory_space<vmem>>, vector<128x256xf32>
    %5 = arith.truncf %4 : vector<128x256xf32> to vector<128x256xbf16>
    %c0_4 = arith.constant 0 : index
    %c0_5 = arith.constant 0 : index
    %6 = vector.load %arg4[%c0_4, %c0_5] : memref<256x128xbf16, #tpu.memory_space<vmem>>, vector<256x128xbf16>
    %cst = arith.constant dense<0.000000e+00> : vector<128x128xf32>
    %7 = tpu.matmul %5, %6, %cst {dimension_numbers = #tpu.dot_dimension_numbers<[1], [0], [0], [1], [0, 0, 1, 1], [], []>} : vector<128x256xbf16>, vector<256x128xbf16>, vector<128x128xf32> -> vector<128x128xf32>
    %8 = arith.addf %3, %7 : vector<128x128xf32>
    %c0_6 = arith.constant 0 : index
    %c0_7 = arith.constant 0 : index
    %9 = vector.load %arg7[%c0_6, %c0_7] : memref<128x128xf32, #tpu.memory_space<vmem>>, vector<128x128xf32>
    tpu.vector_store %arg7[%c0_6, %c0_7], %8 {strides = array<i32>} : memref<128x128xf32, #tpu.memory_space<vmem>>, vector<128x128xf32>,
    %c0_i32_8 = arith.constant 0 : i32
    %10 = arith.cmpi eq, %arg2, %c0_i32_8 : i32
    %11 = arith.extui %10 : i1 to i32
    %c0_i32_9 = arith.constant 0 : i32
    %12 = arith.cmpi ne, %11, %c0_i32_9 : i32
    scf.if %12 {
      %c0_10 = arith.constant 0 : index
      %c0_11 = arith.constant 0 : index
      %13 = vector.load %arg7[%c0_10, %c0_11] : memref<128x128xf32, #tpu.memory_space<vmem>>, vector<128x128xf32>
      %c0_12 = arith.constant 0 : index
      %c0_13 = arith.constant 0 : index
      %14 = vector.load %arg5[%c0_12, %c0_13] : memref<1x128xf32, #tpu.memory_space<vmem>>, vector<1x128xf32>
      %15 = vector.broadcast %14 : vector<1x128xf32> to vector<128x128xf32>
      %16 = arith.addf %13, %15 : vector<128x128xf32>
      %cst_14 = arith.constant 0.000000e+00 : f32
      %17 = vector.broadcast %cst_14 : f32 to vector<128x128xf32>
      %18 = arith.maximumf %16, %17 : vector<128x128xf32>
      %c0_15 = arith.constant 0 : index
      %c0_16 = arith.constant 0 : index
      %19 = vector.load %arg6[%c0_15, %c0_16] : memref<128x128xf32, #tpu.memory_space<vmem>>, vector<128x128xf32>
      tpu.vector_store %arg6[%c0_15, %c0_16], %18 {strides = array<i32>} : memref<128x128xf32, #tpu.memory_space<vmem>>, vector<128x128xf32>,
    } else {
    }
    return
  }
  func.func @transform_0(%arg0: i32, %arg1: i32, %arg2: i32) -> (i32, i32) {
    %c0_i32 = arith.constant 0 : i32
    return %arg0, %arg2 : i32, i32
  }
  func.func @transform_1(%arg0: i32, %arg1: i32, %arg2: i32) -> (i32, i32) {
    %c0_i32 = arith.constant 0 : i32
    return %arg2, %arg1 : i32, i32
  }
  func.func @transform_2(%arg0: i32, %arg1: i32, %arg2: i32) -> (i32, i32) {
    %c0_i32 = arith.constant 0 : i32
    %c0_i32_0 = arith.constant 0 : i32
    return %c0_i32, %arg1 : i32, i32
  }
  func.func @transform_3(%arg0: i32, %arg1: i32, %arg2: i32) -> (i32, i32) {
    %c0_i32 = arith.constant 0 : i32
    return %arg0, %arg1 : i32, i32
  }
}

</mosaic_0001>

<llo_original>
// kernel: tpu_custom_call.1
$region0: #{tpu_custom_call.1}
  #allocation0 [shape = 'u32[]', space=smem, size = 0x4, offset = 0x4, fixed_abs, tag = 'smem constant byte address 0x4 - core index']
  #allocation1 [shape = 'u32[144,128]{1,0:T(1,128)}', space=vmem, size = 0x12000, scoped, tag = 'internal scratch']
  #allocation2 [shape = 'f32[128,128]{1,0:T(8,128)}', space=vmem, size = 0x10000, scoped, tag = 'scratch operand']
  %s0 = inlined_call_operand.hbm [shape: f32[128,256], index: 0, kind: input, shape index: {}]
  %s1 = inlined_call_operand.hbm [shape: bf16[256,128], index: 1, kind: input, shape index: {}]
  %s2 = inlined_call_operand.vmem [shape: f32[1,128], index: 2, kind: input, shape index: {}]
  %s3 = inlined_call_operand.hbm [shape: f32[128,128], index: 3, kind: output, shape index: {}]
  %s4 = sld [smem:[#allocation0]]
  $region38: #{tpu_custom_call.1} parent=0
    _
  %s6 = ssub.s32 1, %s4
  %s7 = scalar_select 0, %s6, %s4
  $region1: #{tpu_custom_call.1} parent=0
    #allocation3 [shape = 'u8[131072]{0}', space=vmem, size = 0x20000, scoped, tag = 'input window, operand 0, single buffered']
    #allocation4 [shape = 's32[1]{0}', space=sflag, size = 0x4, scoped, tag = 'scoped memory for tpu_custom_call.1']
    #allocation5 [shape = 's32[1]{0}', space=sflag, size = 0x4, scoped, tag = 'scoped memory for tpu_custom_call.1']
    #allocation6 [shape = 'u8[65536]{0}', space=vmem, size = 0x10000, scoped, tag = 'input window, operand 1, single buffered']
    #allocation7 [shape = 's32[1]{0}', space=sflag, size = 0x4, scoped, tag = 'scoped memory for tpu_custom_call.1']
    #allocation8 [shape = 'u8[65536]{0}', space=vmem, size = 0x10000, scoped, tag = 'output window, operand 0, single buffered']
    %8 = vsyncpa [#allocation4], 0
    %9 = vsyncpa [#allocation7], 0
    %10 = vsyncpa [#allocation5], 0
    // Predicated region
    $region2: #{tpu_custom_call.1} parent=1 // pred_check
      _
    $region3: #{tpu_custom_call.1} parent=1 // pred_check_branch
      %12 = sbr.rel (0) target = $region5
    $region4: #{tpu_custom_call.1} parent=1 // pred_region
      %s14 = ssub.s32 4096, 4096
      %15 = vsyncadd [#allocation4], %s14
      %s16 = sshll.u32 [#allocation3], 4
      %s17 = int_to_ptr.vmem [resolvable:$true] %s16
      %22 = dma.hbm_to_vmem [thread:$0]  %s0, 4096, %s17, [#allocation4], 256, 256, 16
    $region5: #{tpu_custom_call.1} parent=1 // pred_fallthru
      _
    // Predicated region
    $region6: #{tpu_custom_call.1} parent=1 // pred_check
      _
    $region7: #{tpu_custom_call.1} parent=1 // pred_check_branch
      %24 = sbr.rel (0) target = $region9
    $region8: #{tpu_custom_call.1} parent=1 // pred_region
      %s26 = ssub.s32 2048, 2048
      %27 = vsyncadd [#allocation7], %s26
      %s28 = sshll.u32 [#allocation6], 4
      %s29 = int_to_ptr.vmem [resolvable:$true] %s28
      %34 = dma.hbm_to_vmem [thread:$0]  %s1, 2048, %s29, [#allocation7], 64, 64, 4
    $region9: #{tpu_custom_call.1} parent=1 // pred_fallthru
      _
    // Predicated region
    $region10: #{tpu_custom_call.1} parent=1 // pred_check
      _
    $region11: #{tpu_custom_call.1} parent=1 // pred_check_branch
      %36 = sbr.rel (0) target = $region13
    $region12: #{tpu_custom_call.1} parent=1 // pred_region
      _
    $region13: #{tpu_custom_call.1} parent=1 // pred_fallthru
      _
    // Predicated region
    $region14: #{tpu_custom_call.1} parent=1 // pred_check
      _
    $region15: #{tpu_custom_call.1} parent=1 // pred_check_branch
      %38 = sbr.rel (0) target = $region17
    $region16: #{tpu_custom_call.1} parent=1 // pred_region
      %39 = dma.done [#allocation4], 4096
    $region17: #{tpu_custom_call.1} parent=1 // pred_fallthru
      _
    // Predicated region
    $region18: #{tpu_custom_call.1} parent=1 // pred_check
      _
    $region19: #{tpu_custom_call.1} parent=1 // pred_check_branch
      %41 = sbr.rel (0) target = $region21
    $region20: #{tpu_custom_call.1} parent=1 // pred_region
      %42 = dma.done [#allocation7], 2048
    $region21: #{tpu_custom_call.1} parent=1 // pred_fallthru
      _
    %p44 = scmp.eq.s32.totalorder 0, 0
    // Predicated region
    $region22: #{tpu_custom_call.1} parent=1 // pred_check
      %p45 = pneg %p44
    $region23: #{tpu_custom_call.1} parent=1 // pred_check_branch
      %47 = sbr.rel (%p45) target = $region25
    $region24: #{tpu_custom_call.1} parent=1 // pred_region
      %48 = vst [vmem:[#allocation2] sm:$0xff] 0.0
      %49 = vst [vmem:[#allocation2 + $0x8] sm:$0xff] 0.0
      %50 = vst [vmem:[#allocation2 + $0x10] sm:$0xff] 0.0
      %51 = vst [vmem:[#allocation2 + $0x18] sm:$0xff] 0.0
      %52 = vst [vmem:[#allocation2 + $0x20] sm:$0xff] 0.0
      %53 = vst [vmem:[#allocation2 + $0x28] sm:$0xff] 0.0
      %54 = vst [vmem:[#allocation2 + $0x30] sm:$0xff] 0.0
      %55 = vst [vmem:[#allocation2 + $0x38] sm:$0xff] 0.0
      %56 = vst [vmem:[#allocation2 + $0x40] sm:$0xff] 0.0
      %57 = vst [vmem:[#allocation2 + $0x48] sm:$0xff] 0.0
      %58 = vst [vmem:[#allocation2 + $0x50] sm:$0xff] 0.0
      %59 = vst [vmem:[#allocation2 + $0x58] sm:$0xff] 0.0
      %60 = vst [vmem:[#allocation2 + $0x60] sm:$0xff] 0.0
      %61 = vst [vmem:[#allocation2 + $0x68] sm:$0xff] 0.0
      %62 = vst [vmem:[#allocation2 + $0x70] sm:$0xff] 0.0
      %63 = vst [vmem:[#allocation2 + $0x78] sm:$0xff] 0.0
    $region25: #{tpu_custom_call.1} parent=1 // pred_fallthru
      _
    %v64 = vld [vmem:[#allocation2] sm:$0xff]
    %v65 = vld [vmem:[#allocation2 + $0x8] sm:$0xff]
    %v66 = vld [vmem:[#allocation2 + $0x10] sm:$0xff]
    %v67 = vld [vmem:[#allocation2 + $0x18] sm:$0xff]
    %v68 = vld [vmem:[#allocation2 + $0x20] sm:$0xff]
    %v69 = vld [vmem:[#allocation2 + $0x28] sm:$0xff]
    %v70 = vld [vmem:[#allocation2 + $0x30] sm:$0xff]
    %v71 = vld [vmem:[#allocation2 + $0x38] sm:$0xff]
    %v72 = vld [vmem:[#allocation2 + $0x40] sm:$0xff]
    %v73 = vld [vmem:[#allocation2 + $0x48] sm:$0xff]
    %v74 = vld [vmem:[#allocation2 + $0x50] sm:$0xff]
    %v75 = vld [vmem:[#allocation2 + $0x58] sm:$0xff]
    %v76 = vld [vmem:[#allocation2 + $0x60] sm:$0xff]
    %v77 = vld [vmem:[#allocation2 + $0x68] sm:$0xff]
    %v78 = vld [vmem:[#allocation2 + $0x70] sm:$0xff]
    %v79 = vld [vmem:[#allocation2 + $0x78] sm:$0xff]
    %v80 = vld [vmem:[#allocation3] sm:$0xff]
    %v81 = vld [vmem:[#allocation3 + $0x8] sm:$0xff]
    %v82 = vld [vmem:[#allocation3 + $0x10] sm:$0xff]
    %v83 = vld [vmem:[#allocation3 + $0x18] sm:$0xff]
    %v84 = vld [vmem:[#allocation3 + $0x20] sm:$0xff]
    %v85 = vld [vmem:[#allocation3 + $0x28] sm:$0xff]
    %v86 = vld [vmem:[#allocation3 + $0x30] sm:$0xff]
    %v87 = vld [vmem:[#allocation3 + $0x38] sm:$0xff]
    %v88 = vld [vmem:[#allocation3 + $0x40] sm:$0xff]
    %v89 = vld [vmem:[#allocation3 + $0x48] sm:$0xff]
    %v90 = vld [vmem:[#allocation3 + $0x50] sm:$0xff]
    %v91 = vld [vmem:[#allocation3 + $0x58] sm:$0xff]
    %v92 = vld [vmem:[#allocation3 + $0x60] sm:$0xff]
    %v93 = vld [vmem:[#allocation3 + $0x68] sm:$0xff]
    %v94 = vld [vmem:[#allocation3 + $0x70] sm:$0xff]
    %v95 = vld [vmem:[#allocation3 + $0x78] sm:$0xff]
    %v96 = vld [vmem:[#allocation3 + $0x80] sm:$0xff]
    %v97 = vld [vmem:[#allocation3 + $0x88] sm:$0xff]
    %v98 = vld [vmem:[#allocation3 + $0x90] sm:$0xff]
    %v99 = vld [vmem:[#allocation3 + $0x98] sm:$0xff]
    %v100 = vld [vmem:[#allocation3 + $0xa0] sm:$0xff]
    %v101 = vld [vmem:[#allocation3 + $0xa8] sm:$0xff]
    %v102 = vld [vmem:[#allocation3 + $0xb0] sm:$0xff]
    %v103 = vld [vmem:[#allocation3 + $0xb8] sm:$0xff]
    %v104 = vld [vmem:[#allocation3 + $0xc0] sm:$0xff]
    %v105 = vld [vmem:[#allocation3 + $0xc8] sm:$0xff]
    %v106 = vld [vmem:[#allocation3 + $0xd0] sm:$0xff]
    %v107 = vld [vmem:[#allocation3 + $0xd8] sm:$0xff]
    %v108 = vld [vmem:[#allocation3 + $0xe0] sm:$0xff]
    %v109 = vld [vmem:[#allocation3 + $0xe8] sm:$0xff]
    %v110 = vld [vmem:[#allocation3 + $0xf0] sm:$0xff]
    %v111 = vld [vmem:[#allocation3 + $0xf8] sm:$0xff]
    %v112 = vpack.c.bf16 %v82, %v80
    %v113 = vpack.c.bf16 %v83, %v81
    %v114 = vpack.c.bf16 %v86, %v84
    %v115 = vpack.c.bf16 %v87, %v85
    %v116 = vpack.c.bf16 %v90, %v88
    %v117 = vpack.c.bf16 %v91, %v89
    %v118 = vpack.c.bf16 %v94, %v92
    %v119 = vpack.c.bf16 %v95, %v93
    %v120 = vpack.c.bf16 %v98, %v96
    %v121 = vpack.c.bf16 %v99, %v97
    %v122 = vpack.c.bf16 %v102, %v100
    %v123 = vpack.c.bf16 %v103, %v101
    %v124 = vpack.c.bf16 %v106, %v104
    %v125 = vpack.c.bf16 %v107, %v105
    %v126 = vpack.c.bf16 %v110, %v108
    %v127 = vpack.c.bf16 %v111, %v109
    %v128 = vld [vmem:[#allocation6] sm:$0xf]
    %v129 = vld [vmem:[#allocation6 + $0x4] sm:$0xf]
    %v130 = vld [vmem:[#allocation6 + $0x8] sm:$0xf]
    %v131 = vld [vmem:[#allocation6 + $0xc] sm:$0xf]
    %v132 = vld [vmem:[#allocation6 + $0x10] sm:$0xf]
    %v133 = vld [vmem:[#allocation6 + $0x14] sm:$0xf]
    %v134 = vld [vmem:[#allocation6 + $0x18] sm:$0xf]
    %v135 = vld [vmem:[#allocation6 + $0x1c] sm:$0xf]
    %v136 = vld [vmem:[#allocation6 + $0x20] sm:$0xf]
    %v137 = vld [vmem:[#allocation6 + $0x24] sm:$0xf]
    %v138 = vld [vmem:[#allocation6 + $0x28] sm:$0xf]
    %v139 = vld [vmem:[#allocation6 + $0x2c] sm:$0xf]
    %v140 = vld [vmem:[#allocation6 + $0x30] sm:$0xf]
    %v141 = vld [vmem:[#allocation6 + $0x34] sm:$0xf]
    %v142 = vld [vmem:[#allocation6 + $0x38] sm:$0xf]
    %v143 = vld [vmem:[#allocation6 + $0x3c] sm:$0xf]
    %v144 = vld [vmem:[#allocation6 + $0x40] sm:$0xf]
    %v145 = vld [vmem:[#allocation6 + $0x44] sm:$0xf]
    %v146 = vld [vmem:[#allocation6 + $0x48] sm:$0xf]
    %v147 = vld [vmem:[#allocation6 + $0x4c] sm:$0xf]
    %v148 = vld [vmem:[#allocation6 + $0x50] sm:$0xf]
    %v149 = vld [vmem:[#allocation6 + $0x54] sm:$0xf]
    %v150 = vld [vmem:[#allocation6 + $0x58] sm:$0xf]
    %v151 = vld [vmem:[#allocation6 + $0x5c] sm:$0xf]
    %v152 = vld [vmem:[#allocation6 + $0x60] sm:$0xf]
    %v153 = vld [vmem:[#allocation6 + $0x64] sm:$0xf]
    %v154 = vld [vmem:[#allocation6 + $0x68] sm:$0xf]
    %v155 = vld [vmem:[#allocation6 + $0x6c] sm:$0xf]
    %v156 = vld [vmem:[#allocation6 + $0x70] sm:$0xf]
    %v157 = vld [vmem:[#allocation6 + $0x74] sm:$0xf]
    %v158 = vld [vmem:[#allocation6 + $0x78] sm:$0xf]
    %v159 = vld [vmem:[#allocation6 + $0x7c] sm:$0xf]
    %v192 = vunpack.c.l.b16 %v128
    %v193 = vunpack.c.l.b16 %v129
    %v194 = vunpack.c.l.b16 %v130
    %v195 = vunpack.c.l.b16 %v131
    %v196 = vunpack.c.l.b16 %v132
    %v197 = vunpack.c.l.b16 %v133
    %v198 = vunpack.c.l.b16 %v134
    %v199 = vunpack.c.l.b16 %v135
    %v200 = vunpack.c.l.b16 %v136
    %v201 = vunpack.c.l.b16 %v137
    %v202 = vunpack.c.l.b16 %v138
    %v203 = vunpack.c.l.b16 %v139
    %v204 = vunpack.c.l.b16 %v140
    %v205 = vunpack.c.l.b16 %v141
    %v206 = vunpack.c.l.b16 %v142
    %v207 = vunpack.c.l.b16 %v143
    %v208 = vunpack.c.l.b16 %v144
    %v209 = vunpack.c.l.b16 %v145
    %v210 = vunpack.c.l.b16 %v146
    %v211 = vunpack.c.l.b16 %v147
    %v212 = vunpack.c.l.b16 %v148
    %v213 = vunpack.c.l.b16 %v149
    %v214 = vunpack.c.l.b16 %v150
    %v215 = vunpack.c.l.b16 %v151
    %v216 = vunpack.c.l.b16 %v152
    %v217 = vunpack.c.l.b16 %v153
    %v218 = vunpack.c.l.b16 %v154
    %v219 = vunpack.c.l.b16 %v155
    %v220 = vunpack.c.l.b16 %v156
    %v221 = vunpack.c.l.b16 %v157
    %v222 = vunpack.c.l.b16 %v158
    %v223 = vunpack.c.l.b16 %v159
    %v224 = vpack.c.b16 %v193, %v192
    %v225 = vpack.c.b16 %v195, %v194
    %v226 = vpack.c.b16 %v197, %v196
    %v227 = vpack.c.b16 %v199, %v198
    %v228 = vpack.c.b16 %v201, %v200
    %v229 = vpack.c.b16 %v203, %v202
    %v230 = vpack.c.b16 %v205, %v204
    %v231 = vpack.c.b16 %v207, %v206
    %v232 = vpack.c.b16 %v209, %v208
    %v233 = vpack.c.b16 %v211, %v210
    %v234 = vpack.c.b16 %v213, %v212
    %v235 = vpack.c.b16 %v215, %v214
    %v236 = vpack.c.b16 %v217, %v216
    %v237 = vpack.c.b16 %v219, %v218
    %v238 = vpack.c.b16 %v221, %v220
    %v239 = vpack.c.b16 %v223, %v222
    %256 = vmatprep.subr.bf16.mxu0 0
    %257 = vmatpush1.bf16.msra.mxu0 %v224
    %258 = vmatprep.subr.bf16.mxu0 0
    %259 = vmatpush1.bf16.msra.mxu0 %v225
    %260 = vmatprep.subr.bf16.mxu0 0
    %261 = vmatpush1.bf16.msra.mxu0 %v226
    %262 = vmatprep.subr.bf16.mxu0 0
    %263 = vmatpush1.bf16.msra.mxu0 %v227
    %264 = vmatprep.subr.bf16.mxu0 0
    %265 = vmatpush1.bf16.msra.mxu0 %v228
    %266 = vmatprep.subr.bf16.mxu0 0
    %267 = vmatpush1.bf16.msra.mxu0 %v229
    %268 = vmatprep.subr.bf16.mxu0 0
    %269 = vmatpush1.bf16.msra.mxu0 %v230
    %270 = vmatprep.subr.bf16.mxu0 0
    %271 = vmatpush1.bf16.msra.mxu0 %v231
    %272 = vmatprep.subr.bf16.mxu0 0
    %273 = vmatpush1.bf16.msra.mxu0 %v232
    %274 = vmatprep.subr.bf16.mxu0 0
    %275 = vmatpush1.bf16.msra.mxu0 %v233
    %276 = vmatprep.subr.bf16.mxu0 0
    %277 = vmatpush1.bf16.msra.mxu0 %v234
    %278 = vmatprep.subr.bf16.mxu0 0
    %279 = vmatpush1.bf16.msra.mxu0 %v235
    %280 = vmatprep.subr.bf16.mxu0 0
    %281 = vmatpush1.bf16.msra.mxu0 %v236
    %282 = vmatprep.subr.bf16.mxu0 0
    %283 = vmatpush1.bf16.msra.mxu0 %v237
    %284 = vmatprep.subr.bf16.mxu0 0
    %285 = vmatpush1.bf16.msra.mxu0 %v238
    %286 = vmatprep.subr.bf16.mxu0 0
    %287 = vmatpush1.bf16.msra.mxu0 %v239
    %288 = vmatprep.mubr.bf16.mxu0 %v113
    %289 = vmatmul.mubr.bf16.gmra.mrb[0].mxu0 %v112
    %v290 = vpop.f32.mrb[0].mxu0
    %v291 = vadd.f32 0.0, %v290
    %v292 = vpop.f32.mrb[0].mxu0
    %v293 = vpop.f32.mrb[0].mxu0
    %v294 = vadd.f32 0.0, %v293
    %v295 = vpop.f32.mrb[0].mxu0
    %296 = vmatprep.mubr.bf16.mxu0 %v115
    %297 = vmatmul.mubr.bf16.gmra.mrb[0].mxu0 %v114
    %v298 = vpop.f32.mrb[0].mxu0
    %v299 = vadd.f32 0.0, %v298
    %v300 = vpop.f32.mrb[0].mxu0
    %v301 = vpop.f32.mrb[0].mxu0
    %v302 = vadd.f32 0.0, %v301
    %v303 = vpop.f32.mrb[0].mxu0
    %304 = vmatprep.mubr.bf16.mxu0 %v117
    %305 = vmatmul.mubr.bf16.gmra.mrb[0].mxu0 %v116
    %v306 = vpop.f32.mrb[0].mxu0
    %v307 = vadd.f32 0.0, %v306
    %v308 = vpop.f32.mrb[0].mxu0
    %v309 = vpop.f32.mrb[0].mxu0
    %v310 = vadd.f32 0.0, %v309
    %v311 = vpop.f32.mrb[0].mxu0
    %312 = vmatprep.mubr.bf16.mxu0 %v119
    %313 = vmatmul.mubr.bf16.gmra.mrb[0].mxu0 %v118
    %v314 = vpop.f32.mrb[0].mxu0
    %v315 = vadd.f32 0.0, %v314
    %v316 = vpop.f32.mrb[0].mxu0
    %v317 = vpop.f32.mrb[0].mxu0
    %v318 = vadd.f32 0.0, %v317
    %v319 = vpop.f32.mrb[0].mxu0
    %320 = vmatprep.mubr.bf16.mxu0 %v121
    %321 = vmatmul.mubr.bf16.gmra.mrb[0].mxu0 %v120
    %v322 = vpop.f32.mrb[0].mxu0
    %v323 = vadd.f32 0.0, %v322
    %v324 = vpop.f32.mrb[0].mxu0
    %v325 = vpop.f32.mrb[0].mxu0
    %v326 = vadd.f32 0.0, %v325
    %v327 = vpop.f32.mrb[0].mxu0
    %328 = vmatprep.mubr.bf16.mxu0 %v123
    %329 = vmatmul.mubr.bf16.gmra.mrb[0].mxu0 %v122
    %v330 = vpop.f32.mrb[0].mxu0
    %v331 = vadd.f32 0.0, %v330
    %v332 = vpop.f32.mrb[0].mxu0
    %v333 = vpop.f32.mrb[0].mxu0
    %v334 = vadd.f32 0.0, %v333
    %v335 = vpop.f32.mrb[0].mxu0
    %336 = vmatprep.mubr.bf16.mxu0 %v125
    %337 = vmatmul.mubr.bf16.gmra.mrb[0].mxu0 %v124
    %v338 = vpop.f32.mrb[0].mxu0
    %v339 = vadd.f32 0.0, %v338
    %v340 = vpop.f32.mrb[0].mxu0
    %v341 = vpop.f32.mrb[0].mxu0
    %v342 = vadd.f32 0.0, %v341
    %v343 = vpop.f32.mrb[0].mxu0
    %344 = vmatprep.mubr.bf16.mxu0 %v127
    %345 = vmatmul.mubr.bf16.gmra.mrb[0].mxu0 %v126
    %v346 = vpop.f32.mrb[0].mxu0
    %v347 = vadd.f32 0.0, %v346
    %v348 = vpop.f32.mrb[0].mxu0
    %v349 = vpop.f32.mrb[0].mxu0
    %v350 = vadd.f32 0.0, %v349
    %v351 = vpop.f32.mrb[0].mxu0
    %352 = vdwg.mxu0
    %v353 = vadd.f32 %v64, %v291
    %v354 = vadd.f32 %v65, %v294
    %v355 = vadd.f32 %v66, %v299
    %v356 = vadd.f32 %v67, %v302
    %v357 = vadd.f32 %v68, %v307
    %v358 = vadd.f32 %v69, %v310
    %v359 = vadd.f32 %v70, %v315
    %v360 = vadd.f32 %v71, %v318
    %v361 = vadd.f32 %v72, %v323
    %v362 = vadd.f32 %v73, %v326
    %v363 = vadd.f32 %v74, %v331
    %v364 = vadd.f32 %v75, %v334
    %v365 = vadd.f32 %v76, %v339
    %v366 = vadd.f32 %v77, %v342
    %v367 = vadd.f32 %v78, %v347
    %v368 = vadd.f32 %v79, %v350
    %369 = vst [vmem:[#allocation2] sm:$0xff] %v353
    %370 = vst [vmem:[#allocation2 + $0x8] sm:$0xff] %v354
    %371 = vst [vmem:[#allocation2 + $0x10] sm:$0xff] %v355
    %372 = vst [vmem:[#allocation2 + $0x18] sm:$0xff] %v356
    %373 = vst [vmem:[#allocation2 + $0x20] sm:$0xff] %v357
    %374 = vst [vmem:[#allocation2 + $0x28] sm:$0xff] %v358
    %375 = vst [vmem:[#allocation2 + $0x30] sm:$0xff] %v359
    %376 = vst [vmem:[#allocation2 + $0x38] sm:$0xff] %v360
    %377 = vst [vmem:[#allocation2 + $0x40] sm:$0xff] %v361
    %378 = vst [vmem:[#allocation2 + $0x48] sm:$0xff] %v362
    %379 = vst [vmem:[#allocation2 + $0x50] sm:$0xff] %v363
    %380 = vst [vmem:[#allocation2 + $0x58] sm:$0xff] %v364
    %381 = vst [vmem:[#allocation2 + $0x60] sm:$0xff] %v365
    %382 = vst [vmem:[#allocation2 + $0x68] sm:$0xff] %v366
    %383 = vst [vmem:[#allocation2 + $0x70] sm:$0xff] %v367
    %384 = vst [vmem:[#allocation2 + $0x78] sm:$0xff] %v368
    // Predicated region
    $region26: #{tpu_custom_call.1} parent=1 // pred_check
      %p385 = pneg %p44
    $region27: #{tpu_custom_call.1} parent=1 // pred_check_branch
      %387 = sbr.rel (%p385) target = $region29
    $region28: #{tpu_custom_call.1} parent=1 // pred_region
      %v388 = vld [vmem:[#allocation2] sm:$0xff]
      %v389 = vld [vmem:[#allocation2 + $0x8] sm:$0xff]
      %v390 = vld [vmem:[#allocation2 + $0x10] sm:$0xff]
      %v391 = vld [vmem:[#allocation2 + $0x18] sm:$0xff]
      %v392 = vld [vmem:[#allocation2 + $0x20] sm:$0xff]
      %v393 = vld [vmem:[#allocation2 + $0x28] sm:$0xff]
      %v394 = vld [vmem:[#allocation2 + $0x30] sm:$0xff]
      %v395 = vld [vmem:[#allocation2 + $0x38] sm:$0xff]
      %v396 = vld [vmem:[#allocation2 + $0x40] sm:$0xff]
      %v397 = vld [vmem:[#allocation2 + $0x48] sm:$0xff]
      %v398 = vld [vmem:[#allocation2 + $0x50] sm:$0xff]
      %v399 = vld [vmem:[#allocation2 + $0x58] sm:$0xff]
      %v400 = vld [vmem:[#allocation2 + $0x60] sm:$0xff]
      %v401 = vld [vmem:[#allocation2 + $0x68] sm:$0xff]
      %v402 = vld [vmem:[#allocation2 + $0x70] sm:$0xff]
      %v403 = vld [vmem:[#allocation2 + $0x78] sm:$0xff]
      %v404 = vld [vmem:[%s2] sm:$0x1]
      %v406 = vlaneseq
      %v407 = vshrl.u32 %v406, 7
      %v408 = vsub.s32 0, %v407
      %v409 = vrot.slane %v404, %v408
      %v411 = vadd.f32 %v388, %v409
      %v412 = vadd.f32 %v389, %v409
      %v413 = vadd.f32 %v390, %v409
      %v414 = vadd.f32 %v391, %v409
      %v415 = vadd.f32 %v392, %v409
      %v416 = vadd.f32 %v393, %v409
      %v417 = vadd.f32 %v394, %v409
      %v418 = vadd.f32 %v395, %v409
      %v419 = vadd.f32 %v396, %v409
      %v420 = vadd.f32 %v397, %v409
      %v421 = vadd.f32 %v398, %v409
      %v422 = vadd.f32 %v399, %v409
      %v423 = vadd.f32 %v400, %v409
      %v424 = vadd.f32 %v401, %v409
      %v425 = vadd.f32 %v402, %v409
      %v426 = vadd.f32 %v403, %v409
      %v427 = vmax.f32 %v411, 0.0
      %v428 = vmax.f32 %v412, 0.0
      %v429 = vmax.f32 %v413, 0.0
      %v430 = vmax.f32 %v414, 0.0
      %v431 = vmax.f32 %v415, 0.0
      %v432 = vmax.f32 %v416, 0.0
      %v433 = vmax.f32 %v417, 0.0
      %v434 = vmax.f32 %v418, 0.0
      %v435 = vmax.f32 %v419, 0.0
      %v436 = vmax.f32 %v420, 0.0
      %v437 = vmax.f32 %v421, 0.0
      %v438 = vmax.f32 %v422, 0.0
      %v439 = vmax.f32 %v423, 0.0
      %v440 = vmax.f32 %v424, 0.0
      %v441 = vmax.f32 %v425, 0.0
      %v442 = vmax.f32 %v426, 0.0
      %443 = vst [vmem:[#allocation8] sm:$0xff] %v427
      %444 = vst [vmem:[#allocation8 + $0x8] sm:$0xff] %v428
      %445 = vst [vmem:[#allocation8 + $0x10] sm:$0xff] %v429
      %446 = vst [vmem:[#allocation8 + $0x18] sm:$0xff] %v430
      %447 = vst [vmem:[#allocation8 + $0x20] sm:$0xff] %v431
      %448 = vst [vmem:[#allocation8 + $0x28] sm:$0xff] %v432
      %449 = vst [vmem:[#allocation8 + $0x30] sm:$0xff] %v433
      %450 = vst [vmem:[#allocation8 + $0x38] sm:$0xff] %v434
      %451 = vst [vmem:[#allocation8 + $0x40] sm:$0xff] %v435
      %452 = vst [vmem:[#allocation8 + $0x48] sm:$0xff] %v436
      %453 = vst [vmem:[#allocation8 + $0x50] sm:$0xff] %v437
      %454 = vst [vmem:[#allocation8 + $0x58] sm:$0xff] %v438
      %455 = vst [vmem:[#allocation8 + $0x60] sm:$0xff] %v439
      %456 = vst [vmem:[#allocation8 + $0x68] sm:$0xff] %v440
      %457 = vst [vmem:[#allocation8 + $0x70] sm:$0xff] %v441
      %458 = vst [vmem:[#allocation8 + $0x78] sm:$0xff] %v442
    $region29: #{tpu_custom_call.1} parent=1 // pred_fallthru
      _
    // Predicated region
    $region30: #{tpu_custom_call.1} parent=1 // pred_check
      _
    $region31: #{tpu_custom_call.1} parent=1 // pred_check_branch
      %460 = sbr.rel (0) target = $region33
    $region32: #{tpu_custom_call.1} parent=1 // pred_region
      %s462 = ssub.s32 2048, 2048
      %463 = vsyncadd [#allocation5], %s462
      %s464 = sshll.u32 [#allocation8], 4
      %s465 = int_to_ptr.vmem [resolvable:$true] %s464
      %470 = dma.vmem_to_hbm [thread:$0]  %s465, 2048, %s3, [#allocation5], 128, 128, 8
    $region33: #{tpu_custom_call.1} parent=1 // pred_fallthru
      _
    // Predicated region
    $region34: #{tpu_custom_call.1} parent=1 // pred_check
      _
    $region35: #{tpu_custom_call.1} parent=1 // pred_check_branch
      %472 = sbr.rel (0) target = $region37
    $region36: #{tpu_custom_call.1} parent=1 // pred_region
      %473 = dma.done [#allocation5], 2048
    $region37: #{tpu_custom_call.1} parent=1 // pred_fallthru
      _
    %474 = vsyncpa [#allocation4], 1
    %475 = vsyncpa [#allocation7], 1
    %476 = vsyncpa [#allocation5], 1

</llo_original>
